<compile_context>
chip_gen: v6e
topology: v6e:2x2x1
jax: 0.10.0
libtpu: 0.0.40
codegen_flags: <defaults>
</compile_context>

<pallas_src>
import functools

import jax
import jax.numpy as jnp
from jax.experimental import pallas as pl
from jax.experimental.pallas import tpu as pltpu


def _repset_kernel(x_ref, w_ref, o_ref, *, BT, rpb, H, E, F):
    # x_ref: (BT*rpb, F*d)   w_ref: (F*d, F*E*H)   o_ref: (1, BT, H)
    # One fused MXU matmul (all fold groups and all E element-groups at once),
    # f32 accumulation regardless of operand dtype.
    z = jnp.dot(x_ref[...], w_ref[...], preferred_element_type=jnp.float32)
    z = jnp.maximum(z, 0.0)                                    # relu (VPU)

    # For each fold group f (one original set row), take the max over the E
    # element slices.  Column ordering within a group is c = e*H + h, which
    # matches torch's view(B, N, E, H) followed by max(dim=2).  Summing the F
    # per-row maxima is the first part of the sum over N.  All static lane
    # slices, fully unrolled (F*E is small).
    # TODO(synk): if a bundle dump shows XLU as the critical slot post-fold,
    # restructure these 16-lane slices around pltpu.roll on full-width vregs.
    acc = None
    for f in range(F):
        base = f * E * H
        m = z[:, base:base + H]
        for e in range(1, E):
            m = jnp.maximum(m, z[:, base + e * H:base + (e + 1) * H])
        acc = m if acc is None else acc + m                    # (BT*rpb, H)

    # Remaining sum over N: rpb folded rows per batch element.  rpb % 8 == 0
    # by construction, so the sublane split is tile-aligned (same structure
    # that compiled cleanly in v2).
    o_ref[0] = jnp.sum(acc.reshape(BT, rpb, H), axis=1).astype(o_ref.dtype)


def _round_up(v, m):
    return -(-v // m) * m


def approx_rep_set(X, Wc, n_hidden_sets, n_elements, *,
                   use_bf16=True, rows_per_tile=None):
    """X: (B, N, d) float32, Wc: (d, n_hidden_sets * n_elements) float32."""
    B, N, d = X.shape
    H, E = n_hidden_sets, n_elements
    assert Wc.shape == (d, H * E)

    op_dtype = jnp.bfloat16 if use_bf16 else jnp.float32
    op_bytes = 2 if use_bf16 else 4

    # ---- pad the set dimension to a sublane multiple -----------------------
    N_pad = _round_up(N, 8)

    # ---- K-fold factor ------------------------------------------------------
    # Fold F consecutive set rows of one batch element into the contraction
    # dim (K = F*d) against a block-diagonal RHS.  Require rpb = N_pad // F to
    # be a multiple of 8 so the grouped-sum reshape stays sublane-aligned.
    F = 1
    for cand in (8, 4, 2):
        if cand * d <= 128 and N_pad % (8 * cand) == 0:
            F = cand
            break
    rpb = N_pad // F

    # ---- tile sizing --------------------------------------------------------
    if rows_per_tile is None:
        # Target X blocks in the ~0.5-2 MB range (before lane padding); a bit
        # larger when the K-fold shrinks the per-row intermediate footprint.
        rows_per_tile = (16384 if use_bf16 else 8192) * min(F, 2)

    BT = max(1, rows_per_tile // N_pad)            # batch elements per step
    cap = B if B < 2 else -(-B // 2)               # keep G >= 2 (v7x megacore)
    BT = max(1, min(BT, cap))
    if use_bf16 and (BT * rpb) % 16 != 0:
        BT += 1                                    # bf16 min sublane tile is 16

    G = -(-B // BT)                                # grid steps
    B_pad = G * BT

    # ---- pad / reshape operands (zero padding is exact) --------------------
    if N_pad != N or B_pad != B:
        X = jnp.pad(X, ((0, B_pad - B), (0, N_pad - N), (0, 0)))
    TMf = BT * rpb                                 # matmul rows per grid step
    X_fold = X.reshape(B_pad * rpb, F * d).astype(op_dtype)

    if F == 1:
        W = Wc.astype(op_dtype)
    else:
        W = jnp.kron(jnp.eye(F, dtype=Wc.dtype), Wc).astype(op_dtype)  # (F*d, F*E*H)

    K = F * d
    NW = F * E * H

    # ---- VMEM budget (lane-padded) ------------------------------------------
    est = (
        2 * TMf * _round_up(K, 128) * op_bytes     # X block, double-buffered
        + 2 * K * _round_up(NW, 128) * op_bytes    # W (resident, <=2 buffers)
        + 2 * BT * _round_up(H, 128) * 4           # output block, double-buffered
        + TMf * _round_up(NW, 128) * 4             # z (f32 MXU result)
        + 2 * TMf * _round_up(H, 128) * 4          # max / grouped-sum temporaries
    )
    vmem_limit = int(min(max(est * 5 // 4, 32 * 1024 * 1024), 64 * 1024 * 1024))

    kernel = functools.partial(_repset_kernel, BT=BT, rpb=rpb, H=H, E=E, F=F)

    out = pl.pallas_call(
        kernel,
        out_shape=jax.ShapeDtypeStruct((G, BT, H), jnp.float32),
        grid_spec=pltpu.PrefetchScalarGridSpec(
            num_scalar_prefetch=0,
            grid=(G,),
            in_specs=[
                # X streams: one (TMf, F*d) row tile per step, double-buffered.
                pl.BlockSpec((TMf, K), lambda g: (g, 0)),
                # W is small and revisited (constant block index) -> stays in VMEM.
                pl.BlockSpec((K, NW), lambda g: (0, 0)),
            ],
            # Output is tiny (BT*H*4 bytes/step); lane-dense flattening of the
            # store is deliberately skipped until profiling shows it exposed.
            out_specs=pl.BlockSpec((1, BT, H), lambda g: (g, 0, 0)),
        ),
        compiler_params=pltpu.CompilerParams(
            dimension_semantics=("parallel",),
            vmem_limit_bytes=vmem_limit),
    )(X_fold, W)

    return out.reshape(B_pad, H)[:B]


def approx_rep_set_ref(X, Wc, n_hidden_sets, n_elements):
    """Pure-JAX reference mirroring the PyTorch forward."""
    B, N, d = X.shape
    H, E = n_hidden_sets, n_elements
    t = jnp.maximum(jnp.matmul(X, Wc), 0.0)            # (B, N, H*E)
    t = t.reshape(B, N, E, H)
    t = jnp.max(t, axis=2)                              # (B, N, H)
    return jnp.sum(t, axis=1)                           # (B, H)


if __name__ == "__main__":
    n_hidden_sets, n_elements = 16, 4

    def run_case(B, N, d, key):
        kx, kw = jax.random.split(key)
        X = jax.random.normal(kx, (B, N, d), dtype=jnp.float32)
        # Wc.data.uniform_(-1, 1) equivalent, deterministic.
        Wc = jax.random.uniform(kw, (d, n_hidden_sets * n_elements),
                                dtype=jnp.float32, minval=-1.0, maxval=1.0)
        ref = approx_rep_set_ref(X, Wc, n_hidden_sets, n_elements)

        # Exact f32 path (strict tolerance vs. the torch-style reference).
        out32 = approx_rep_set(X, Wc, n_hidden_sets, n_elements, use_bf16=False)
        out32 = jax.block_until_ready(out32)
        assert out32.shape == (B, n_hidden_sets)
        assert jnp.allclose(out32, ref, atol=5e-3, rtol=1e-4), (B, N, d, "f32")

        # Default bf16-operand path (f32 accumulation; relaxed tolerance).
        out16 = approx_rep_set(X, Wc, n_hidden_sets, n_elements)
        out16 = jax.block_until_ready(out16)
        assert out16.shape == (B, n_hidden_sets)
        assert jnp.allclose(out16, ref, atol=1.0, rtol=5e-2), (B, N, d, "bf16")

    key = jax.random.PRNGKey(0)
    k1, k2, k3 = jax.random.split(key, 3)
    run_case(2, 8, 32, k1)     # tiny case (F=1 path, matches module example)
    run_case(8, 32, 32, k2)    # K-fold F=4 path, 2 grid steps
    run_case(3, 10, 32, k3)    # N and B padding, K-fold F=2 path
    print("KERNEL_OK")
</pallas_src>

<mosaic_0001>
module attributes {stable_mosaic.version = 11 : i64} {
  func.func @_repset_kernel(%arg0: i32, %arg1: memref<8x32xf32, #tpu.memory_space<vmem>>, %arg2: memref<32x64xf32, #tpu.memory_space<vmem>>, %arg3: memref<1x1x16xf32, #tpu.memory_space<vmem>>) attributes {dimension_semantics = [#tpu.dimension_semantics<parallel>], iteration_bounds = array<i64: 2>, scalar_prefetch = 0 : i64, scratch_operands = 0 : i64, tpu.core_type = #tpu.core_type<tc>, window_params = [{transform_indices = @transform_0, window_bounds = array<i64: 8, 32>}, {pipeline_mode = #tpu.pipeline_mode<synchronous>, transform_indices = @transform_1, window_bounds = array<i64: 32, 64>}, {transform_indices = @transform_2, window_bounds = array<i64: 1, 1, 16>}]} {
    %c0 = arith.constant 0 : index
    %c0_0 = arith.constant 0 : index
    %0 = vector.load %arg1[%c0, %c0_0] : memref<8x32xf32, #tpu.memory_space<vmem>>, vector<8x32xf32>
    %c0_1 = arith.constant 0 : index
    %c0_2 = arith.constant 0 : index
    %1 = vector.load %arg2[%c0_1, %c0_2] : memref<32x64xf32, #tpu.memory_space<vmem>>, vector<32x64xf32>
    %cst = arith.constant dense<0.000000e+00> : vector<8x64xf32>
    %2 = tpu.matmul %0, %1, %cst {dimension_numbers = #tpu.dot_dimension_numbers<[1], [0], [0], [1], [0, 0, 1, 1], [], []>} : vector<8x32xf32>, vector<32x64xf32>, vector<8x64xf32> -> vector<8x64xf32>
    %cst_3 = arith.constant 0.000000e+00 : f32
    %3 = vector.broadcast %cst_3 : f32 to vector<8x64xf32>
    %4 = arith.maximumf %2, %3 : vector<8x64xf32>
    %5 = vector.extract_strided_slice %4 {offsets = [0, 0], sizes = [8, 16], strides = [1, 1]} : vector<8x64xf32> to vector<8x16xf32>
    %6 = vector.extract_strided_slice %4 {offsets = [0, 16], sizes = [8, 16], strides = [1, 1]} : vector<8x64xf32> to vector<8x16xf32>
    %7 = arith.maximumf %5, %6 : vector<8x16xf32>
    %8 = vector.extract_strided_slice %4 {offsets = [0, 32], sizes = [8, 16], strides = [1, 1]} : vector<8x64xf32> to vector<8x16xf32>
    %9 = arith.maximumf %7, %8 : vector<8x16xf32>
    %10 = vector.extract_strided_slice %4 {offsets = [0, 48], sizes = [8, 16], strides = [1, 1]} : vector<8x64xf32> to vector<8x16xf32>
    %11 = arith.maximumf %9, %10 : vector<8x16xf32>
    %12 = vector.shape_cast %11 : vector<8x16xf32> to vector<1x8x16xf32>
    %cst_4 = arith.constant dense<0.000000e+00> : vector<1x16xf32>
    %13 = vector.multi_reduction <add>, %12, %cst_4 [1] : vector<1x8x16xf32> to vector<1x16xf32>
    %c0_5 = arith.constant 0 : index
    %c0_6 = arith.constant 0 : index
    %c0_7 = arith.constant 0 : index
    %14 = vector.load %arg3[%c0_5, %c0_6, %c0_7] : memref<1x1x16xf32, #tpu.memory_space<vmem>>, vector<1x1x16xf32>
    %15 = vector.shape_cast %14 : vector<1x1x16xf32> to vector<1x16xf32>
    %16 = vector.shape_cast %13 : vector<1x16xf32> to vector<1x1x16xf32>
    tpu.vector_store %arg3[%c0_5, %c0_6, %c0_7], %16 {strides = array<i32>} : memref<1x1x16xf32, #tpu.memory_space<vmem>>, vector<1x1x16xf32>,
    return
  }
  func.func @transform_0(%arg0: i32) -> (i32, i32) {
    %c0_i32 = arith.constant 0 : i32
    %c0_i32_0 = arith.constant 0 : i32
    return %arg0, %c0_i32 : i32, i32
  }
  func.func @transform_1(%arg0: i32) -> (i32, i32) {
    %c0_i32 = arith.constant 0 : i32
    %c0_i32_0 = arith.constant 0 : i32
    %c0_i32_1 = arith.constant 0 : i32
    return %c0_i32, %c0_i32_0 : i32, i32
  }
  func.func @transform_2(%arg0: i32) -> (i32, i32, i32) {
    %c0_i32 = arith.constant 0 : i32
    %c0_i32_0 = arith.constant 0 : i32
    %c0_i32_1 = arith.constant 0 : i32
    return %arg0, %c0_i32, %c0_i32_0 : i32, i32, i32
  }
}

</mosaic_0001>

<llo_original>
// kernel: tpu_custom_call.1
$region0: #{tpu_custom_call.1}
  #allocation0 [shape = 'u32[]', space=smem, size = 0x4, offset = 0x4, fixed_abs, tag = 'smem constant byte address 0x4 - core index']
  #allocation1 [shape = 'u32[144,128]{1,0:T(1,128)}', space=vmem, size = 0x12000, scoped, tag = 'internal scratch']
  %s0 = inlined_call_operand.hbm [shape: f32[16,32], index: 0, kind: input, shape index: {}]
  %s1 = inlined_call_operand.hbm [shape: f32[32,64], index: 1, kind: input, shape index: {}]
  %s2 = inlined_call_operand.hbm [shape: f32[2,1,16], index: 2, kind: output, shape index: {}]
  %s3 = sld [smem:[#allocation0]]
  $region49: #{tpu_custom_call.1} parent=0
    _
  %s5 = ssub.s32 1, %s3
  %s6 = scalar_select 0, %s5, %s3
  $region1: #{tpu_custom_call.1} parent=0
    #allocation2 [shape = 'u8[8192]{0}', space=vmem, size = 0x2000, scoped, tag = 'input window, operand 0']
    #allocation3 [shape = 's32[2]{0}', space=sflag, size = 0x8, scoped, tag = 'scoped memory for tpu_custom_call.1']
    #allocation4 [shape = 's32[2]{0}', space=sflag, size = 0x8, scoped, tag = 'scoped memory for tpu_custom_call.1']
    #allocation5 [shape = 'u8[16384]{0}', space=vmem, size = 0x4000, scoped, tag = 'input window, operand 1, single buffered']
    #allocation6 [shape = 's32[1]{0}', space=sflag, size = 0x4, scoped, tag = 'scoped memory for tpu_custom_call.1']
    #allocation7 [shape = 'u8[1024]{0}', space=vmem, size = 0x400, scoped, tag = 'output window, operand 0']
    %7 = vsyncpa [#allocation3], 0
    %s8 = scalar_lea.sflag [#allocation3], 1
    %9 = vsyncpa %s8, 0
    %10 = vsyncpa [#allocation6], 0
    %11 = vsyncpa [#allocation4], 0
    %s12 = scalar_lea.sflag [#allocation4], 1
    %13 = vsyncpa %s12, 0
    loop: start=0, step=1, limit=4
    $region2: #{tpu_custom_call.1} parent=1 // loop_pre_header
      _
    $region3: #{tpu_custom_call.1} parent=1 // loop_header
      %s15 = sphi 0, %s19
      %p16 = scmp.ge.s32.totalorder %s15, 4
      %s25 = sphi 0, %s27
      %s28 = sphi 0, %s25
      %s29 = sphi 0, %s28
      %s45 = sphi 0, %s29
      %s49 = sphi 0, %s49
      %s51 = sphi 0, %s49
      %s52 = sphi 0, %s51
      %s66 = sphi 0, %s52
      %s72 = sphi 0, %s74
      %s75 = sphi 0, %s72
      %s76 = sphi 0, %s75
      %s92 = sphi 0, %s76
    $region4: #{tpu_custom_call.1} parent=1 // loop_header_branch
      %18 = sbr.rel (%p16) target = $region8
    $region5: #{tpu_custom_call.1} parent=1 // loop_body
      %s20 = ssub.s32 %s15, 1
      %s21 = ssub.s32 %s15, 2
      %s22 = sadd.s32 %s15, 1
      %s23 = ssub.s32 %s15, %s22
      %p24 = scmp.eq.s32.totalorder %s23, 0
      %s26 = sadd.s32 %s25, 1
      %s27 = scalar_select %p24, %s25, %s26
      %p30 = pneg %p24
      %p31 = scmp.eq.s32.totalorder %s15, 1
      %p32 = por %p30, %p31
      %p33 = scmp.ne.s32.totalorder %s25, %s28
      %p34 = scmp.eq.s32.totalorder %s15, 0
      %p35 = por %p33, %p34
      %p36 = scmp.ne.s32.totalorder %s25, %s28
      %p37 = scmp.eq.s32.totalorder %s20, 1
      %p38 = por %p36, %p37
      %p39 = scmp.ne.s32.totalorder %s28, %s29
      %p40 = scmp.eq.s32.totalorder %s20, 0
      %p41 = por %p39, %p40
      %p42 = scmp.ne.s32.totalorder %s28, %s29
      %p43 = scmp.eq.s32.totalorder %s21, 1
      %p44 = por %p42, %p43
      %p46 = scmp.ne.s32.totalorder %s29, %s45
      %p47 = scmp.eq.s32.totalorder %s21, 0
      %p48 = por %p46, %p47
      %s50 = sadd.s32 %s49, 1
      %p53 = scmp.eq.s32.totalorder %s15, 1
      %p54 = scmp.ne.s32.totalorder %s49, %s51
      %p55 = scmp.eq.s32.totalorder %s15, 0
      %p56 = por %p54, %p55
      %p57 = scmp.ne.s32.totalorder %s49, %s51
      %p58 = scmp.eq.s32.totalorder %s20, 1
      %p59 = por %p57, %p58
      %p60 = scmp.ne.s32.totalorder %s51, %s52
      %p61 = scmp.eq.s32.totalorder %s20, 0
      %p62 = por %p60, %p61
      %p63 = scmp.ne.s32.totalorder %s51, %s52
      %p64 = scmp.eq.s32.totalorder %s21, 1
      %p65 = por %p63, %p64
      %p67 = scmp.ne.s32.totalorder %s52, %s66
      %p68 = scmp.eq.s32.totalorder %s21, 0
      %p69 = por %p67, %p68
      %s70 = ssub.s32 %s15, %s22
      %p71 = scmp.eq.s32.totalorder %s70, 0
      %s73 = sadd.s32 %s72, 1
      %s74 = scalar_select %p71, %s72, %s73
      %p77 = pneg %p71
      %p78 = scmp.eq.s32.totalorder %s15, 1
      %p79 = por %p77, %p78
      %p80 = scmp.ne.s32.totalorder %s72, %s75
      %p81 = scmp.eq.s32.totalorder %s15, 0
      %p82 = por %p80, %p81
      %p83 = scmp.ne.s32.totalorder %s72, %s75
      %p84 = scmp.eq.s32.totalorder %s20, 1
      %p85 = por %p83, %p84
      %p86 = scmp.ne.s32.totalorder %s75, %s76
      %p87 = scmp.eq.s32.totalorder %s20, 0
      %p88 = por %p86, %p87
      %p89 = scmp.ne.s32.totalorder %s75, %s76
      %p90 = scmp.eq.s32.totalorder %s21, 1
      %p91 = por %p89, %p90
      %p93 = scmp.ne.s32.totalorder %s76, %s92
      %p94 = scmp.eq.s32.totalorder %s21, 0
      %p95 = por %p93, %p94
      %p96 = scmp.le.s32.totalorder 1, %s15
      %p97 = scmp.lt.s32.totalorder %s15, 3
      %p98 = pnand %p96, %p97
      %p99 = pneg %p98
      // Predicated region
      $region9: #{tpu_custom_call.1} parent=5 // pred_check
        _
      $region10: #{tpu_custom_call.1} parent=5 // pred_check_branch
        %101 = sbr.rel (%p98) target = $region12
      $region11: #{tpu_custom_call.1} parent=5 // pred_region
        %s102 = ssub.s32 %s15, 1
        // Predicated region
        $region13: #{tpu_custom_call.1} parent=11 // pred_check
          %p103 = pneg %p62
        $region14: #{tpu_custom_call.1} parent=11 // pred_check_branch
          %105 = sbr.rel (%p103) target = $region16
        $region15: #{tpu_custom_call.1} parent=11 // pred_region
          %s107 = ssub.s32 512, 512
          %108 = vsyncadd [#allocation6], %s107
          %s109 = sshll.u32 [#allocation5], 4
          %s110 = int_to_ptr.vmem [resolvable:$true] %s109
          %115 = dma.hbm_to_vmem [thread:$0]  %s1, 512, %s110, [#allocation6], 128, 128, 8
        $region16: #{tpu_custom_call.1} parent=11 // pred_fallthru
          _
      $region12: #{tpu_custom_call.1} parent=5 // pred_fallthru
        _
      %p116 = scmp.lt.s32.totalorder %s15, 2
      // Predicated region
      $region17: #{tpu_custom_call.1} parent=5 // pred_check
        %p117 = pneg %p116
      $region18: #{tpu_custom_call.1} parent=5 // pred_check_branch
        %119 = sbr.rel (%p117) target = $region20
      $region19: #{tpu_custom_call.1} parent=5 // pred_region
        // Predicated region
        $region21: #{tpu_custom_call.1} parent=19 // pred_check
          %p120 = pneg %p35
        $region22: #{tpu_custom_call.1} parent=19 // pred_check_branch
          %122 = sbr.rel (%p120) target = $region24
        $region23: #{tpu_custom_call.1} parent=19 // pred_region
          %s123 = sand.u32 %s25, 1
          %s124 = scalar_lea.sflag [#allocation3], %s123
          %s125 = sand.u32 %s25, 1
          %s126 = smul.addr %s125, 8
          %s127 = scalar_lea.vmem [#allocation2], %s126
          %s129 = ssub.s32 128, 128
          %130 = vsyncadd %s124, %s129
          %s131 = smul.addr %s15, 128
          %s132 = scalar_lea.hbm %s0, %s131
          %s134 = sshll.u32 %s127, 4
          %s135 = int_to_ptr.vmem [resolvable:$true] %s134
          %137 = dma.hbm_to_vmem [thread:$0]  %s132, 128, %s135, %s124
        $region24: #{tpu_custom_call.1} parent=19 // pred_fallthru
          _
      $region20: #{tpu_custom_call.1} parent=5 // pred_fallthru
        _
      %p138 = scmp.le.s32.totalorder 1, %s15
      %p139 = scmp.lt.s32.totalorder %s15, 3
      %p140 = pnand %p138, %p139
      %p141 = pneg %p140
      // Predicated region
      $region25: #{tpu_custom_call.1} parent=5 // pred_check
        _
      $region26: #{tpu_custom_call.1} parent=5 // pred_check_branch
        %143 = sbr.rel (%p140) target = $region28
      $region27: #{tpu_custom_call.1} parent=5 // pred_region
        %s144 = ssub.s32 %s15, 1
        %s145 = sand.u32 %s28, 1
        %s146 = scalar_lea.sflag [#allocation3], %s145
        %s147 = sand.u32 %s28, 1
        %s148 = smul.addr %s147, 8
        %s149 = scalar_lea.vmem [#allocation2], %s148
        // Predicated region
        $region29: #{tpu_custom_call.1} parent=27 // pred_check
          %p150 = pneg %p41
        $region30: #{tpu_custom_call.1} parent=27 // pred_check_branch
          %152 = sbr.rel (%p150) target = $region32
        $region31: #{tpu_custom_call.1} parent=27 // pred_region
          %153 = dma.done %s146, 128
        $region32: #{tpu_custom_call.1} parent=27 // pred_fallthru
          _
        // Predicated region
        $region33: #{tpu_custom_call.1} parent=27 // pred_check
          %p154 = pneg %p62
        $region34: #{tpu_custom_call.1} parent=27 // pred_check_branch
          %156 = sbr.rel (%p154) target = $region36
        $region35: #{tpu_custom_call.1} parent=27 // pred_region
          %157 = dma.done [#allocation6], 512
        $region36: #{tpu_custom_call.1} parent=27 // pred_fallthru
          _
        %s158 = sand.u32 %s28, 1
        %s159 = scalar_lea.sflag [#allocation3], %s158
        %s160 = sand.u32 %s28, 1
        %s161 = smul.addr %s160, 8
        %s162 = scalar_lea.vmem [#allocation2], %s161
        %p163 = pneg %p41
        %p164 = pneg %p38
        %p165 = pneg %p62
        %p166 = pneg %p59
        %p167 = pneg %p88
        %p168 = pneg %p85
        %s169 = sand.u32 %s75, 1
        %s170 = scalar_lea.sflag [#allocation4], %s169
        %s171 = sand.u32 %s75, 1
        %s172 = scalar_lea.vmem [#allocation7], %s171
        %v173 = vld [vmem:[%s149] sm:$0xff]
        %v174 = vld [vmem:[#allocation5] sm:$0xff]
        %v175 = vld [vmem:[#allocation5 + $0x8] sm:$0xff]
        %v176 = vld [vmem:[#allocation5 + $0x10] sm:$0xff]
        %v177 = vld [vmem:[#allocation5 + $0x18] sm:$0xff]
        %vm178 = vcmask 261120
        %v180 = vsel %vm178, %v173, 0
        %182 = vmatprep.subr.mxu0 0.0
        %183 = vmatpush1.msra.mxu0 0.0
        %184 = vmatprep.subr.mxu0 0.0
        %185 = vmatpush1.msra.mxu0 0.0
        %186 = vmatprep.subr.mxu0 0.0
        %187 = vmatpush1.msra.mxu0 0.0
        %188 = vmatprep.subr.mxu0 0.0
        %189 = vmatpush1.msra.mxu0 0.0
        %190 = vmatprep.subr.mxu0 0.0
        %191 = vmatpush1.msra.mxu0 0.0
        %192 = vmatprep.subr.mxu0 0.0
        %193 = vmatpush1.msra.mxu0 0.0
        %194 = vmatprep.subr.mxu0 0.0
        %195 = vmatpush1.msra.mxu0 0.0
        %196 = vmatprep.subr.mxu0 0.0
        %197 = vmatpush1.msra.mxu0 0.0
        %198 = vmatprep.subr.mxu0 0.0
        %199 = vmatpush1.msra.mxu0 0.0
        %200 = vmatprep.subr.mxu0 0.0
        %201 = vmatpush1.msra.mxu0 0.0
        %202 = vmatprep.subr.mxu0 0.0
        %203 = vmatpush1.msra.mxu0 0.0
        %204 = vmatprep.subr.mxu0 0.0
        %205 = vmatpush1.msra.mxu0 0.0
        %206 = vmatprep.subr.mxu0 0.0
        %207 = vmatpush1.msra.mxu0 %v177
        %208 = vmatprep.subr.mxu0 0.0
        %209 = vmatpush1.msra.mxu0 %v176
        %210 = vmatprep.subr.mxu0 0.0
        %211 = vmatpush1.msra.mxu0 %v175
        %212 = vmatprep.subr.mxu0 0.0
        %213 = vmatpush1.msra.mxu0 %v174
        %214 = vmatprep.subr.mxu0 0.0
        %215 = vmatpush2.msra.mxu0 0.0
        %216 = vmatprep.subr.mxu0 0.0
        %217 = vmatpush2.msra.mxu0 0.0
        %218 = vmatprep.subr.mxu0 0.0
        %219 = vmatpush2.msra.mxu0 0.0
        %220 = vmatprep.subr.mxu0 0.0
        %221 = vmatpush2.msra.mxu0 0.0
        %222 = vmatprep.subr.mxu0 0.0
        %223 = vmatpush2.msra.mxu0 0.0
        %224 = vmatprep.subr.mxu0 0.0
        %225 = vmatpush2.msra.mxu0 0.0
        %226 = vmatprep.subr.mxu0 0.0
        %227 = vmatpush2.msra.mxu0 0.0
        %228 = vmatprep.subr.mxu0 0.0
        %229 = vmatpush2.msra.mxu0 0.0
        %230 = vmatprep.subr.mxu0 0.0
        %231 = vmatpush2.msra.mxu0 0.0
        %232 = vmatprep.subr.mxu0 0.0
        %233 = vmatpush2.msra.mxu0 0.0
        %234 = vmatprep.subr.mxu0 0.0
        %235 = vmatpush2.msra.mxu0 0.0
        %236 = vmatprep.subr.mxu0 0.0
        %237 = vmatpush2.msra.mxu0 0.0
        %238 = vmatprep.subr.mxu0 0.0
        %239 = vmatpush2.msra.mxu0 0.0
        %240 = vmatprep.subr.mxu0 0.0
        %241 = vmatpush2.msra.mxu0 0.0
        %242 = vmatprep.subr.mxu0 0.0
        %243 = vmatpush2.msra.mxu0 0.0
        %244 = vmatprep.subr.mxu0 0.0
        %245 = vmatpush2.msra.mxu0 0.0
        %246 = vmatprep.mubr.f32.mxu0 0.0
        %247 = vmatmul.mubr.f32.gmra.mxu0 %v180
        %v248 = vpop.f32.mrf.mxu0
        %v249 = vadd.f32 0.0, %v248
        %v250 = vpop.f32.mrf.mxu0
        %251 = vdwg.mxu0
        %v252 = vmax.f32 %v249, 0.0
        %254 = vrot.lane.b32.xlu0 %v252, 112
        %v255 = vpop.permute.xlu0 %254
        %v257 = vmax.f32 %v252, %v255
        %258 = vrot.lane.b32.xlu0 %v252, 96
        %v259 = vpop.permute.xlu0 %258
        %v261 = vmax.f32 %v257, %v259
        %262 = vrot.lane.b32.xlu0 %v252, 80
        %v263 = vpop.permute.xlu0 %262
        %v265 = vmax.f32 %v261, %v263
        %vm266 = vcmask 130048
        %v267 = vsel %vm266, %v265, 0.0
        %v268 = vrot.slane %v267, 4
        %v269 = vadd.f32 %v267, %v268
        %v270 = vrot.slane %v269, 2
        %v271 = vadd.f32 %v269, %v270
        %v272 = vrot.slane %v271, 1
        %v273 = vadd.f32 %v271, %v272
        %vm274 = vcmask 122880
        %275 = vst.msk [vmem:[%s172] sm:$0x1] %vm274, %v273
        %s276 = sand.u32 %s75, 1
        %s277 = scalar_lea.sflag [#allocation4], %s276
        %s278 = sand.u32 %s75, 1
        %s279 = scalar_lea.vmem [#allocation7], %s278
        // Predicated region
        $region37: #{tpu_custom_call.1} parent=27 // pred_check
          %p280 = pneg %p85
        $region38: #{tpu_custom_call.1} parent=27 // pred_check_branch
          %282 = sbr.rel (%p280) target = $region40
        $region39: #{tpu_custom_call.1} parent=27 // pred_region
          %s284 = ssub.s32 16, 16
          %285 = vsyncadd %s277, %s284
          %s286 = smul.addr %s20, 16
          %s287 = scalar_lea.hbm %s2, %s286
          %s289 = sshll.u32 %s279, 4
          %s290 = int_to_ptr.vmem [resolvable:$true] %s289
          %292 = dma.vmem_to_hbm [thread:$0]  %s290, 16, %s287, %s277
        $region40: #{tpu_custom_call.1} parent=27 // pred_fallthru
          _
      $region28: #{tpu_custom_call.1} parent=5 // pred_fallthru
        _
      %p293 = scmp.le.s32.totalorder 2, %s15
      // Predicated region
      $region41: #{tpu_custom_call.1} parent=5 // pred_check
        %p294 = pneg %p293
      $region42: #{tpu_custom_call.1} parent=5 // pred_check_branch
        %296 = sbr.rel (%p294) target = $region44
      $region43: #{tpu_custom_call.1} parent=5 // pred_region
        %s297 = ssub.s32 %s15, 2
        // Predicated region
        $region45: #{tpu_custom_call.1} parent=43 // pred_check
          %p298 = pneg %p91
        $region46: #{tpu_custom_call.1} parent=43 // pred_check_branch
          %300 = sbr.rel (%p298) target = $region48
        $region47: #{tpu_custom_call.1} parent=43 // pred_region
          %s301 = sand.u32 %s76, 1
          %s302 = scalar_lea.sflag [#allocation4], %s301
          %s303 = sand.u32 %s76, 1
          %s304 = scalar_lea.vmem [#allocation7], %s303
          %305 = dma.done %s302, 16
        $region48: #{tpu_custom_call.1} parent=43 // pred_fallthru
          _
      $region44: #{tpu_custom_call.1} parent=5 // pred_fallthru
        _
    $region6: #{tpu_custom_call.1} parent=1 // loop_footer
      %s19 = sadd.s32 1, %s15
    $region7: #{tpu_custom_call.1} parent=1 // loop_footer_branch
      %14 = sbr.rel target = $region3
    $region8: #{tpu_custom_call.1} parent=1 // loop_exit
      _
    %306 = vsyncpa [#allocation3], 1
    %s307 = scalar_lea.sflag [#allocation3], 1
    %308 = vsyncpa %s307, 1
    %309 = vsyncpa [#allocation6], 1
    %310 = vsyncpa [#allocation4], 1
    %s311 = scalar_lea.sflag [#allocation4], 1
    %312 = vsyncpa %s311, 1

</llo_original>
